<compile_context>
chip_gen: v6e
topology: v6e:2x2x1
jax: 0.10.0
libtpu: 0.0.40
codegen_flags: <defaults>
</compile_context>

<pallas_src>
import jax
import jax.numpy as jnp
import numpy as np
from jax.experimental import pallas as pl
from jax.experimental.pallas import tpu as pltpu

# ---- model dims (small, consistent with the module's forward) ----------------
IN_FEATURES = 28 * 28              # 784, fixed by x.view(B, 28*28, 1, 1)
WIDTH_MULT = 0.125                 # args.width_mult (chosen small); dim = 2048
HIDDEN = int(2048 * WIDTH_MULT)    # 256
NUM_CLASSES = 10
BN_EPS = 1e-5

C_PAD = 128                        # 10 -> 128 lane-dense output columns


def _round_up(n, m):
    return ((n + m - 1) // m) * m


def _pick_batch_tile(b):
    """Batch tile: single step for tiny B, else >=2 steps (v7x megacore) with big tiles."""
    b8 = _round_up(b, 8)
    if b8 <= 256:
        return b8                                   # one step; too small to split usefully
    if b8 <= 2048:
        return _round_up((b8 + 1) // 2, 8)          # exactly 2 steps -> both v7x TCs busy
    return 1024                                     # large batch: big tiles, many steps


def _swish(h):
    # h * sigmoid(h); exp + approx reciprocal both run on the EUP slot (free vs MXU/VPU).
    return h * pl.reciprocal(1.0 + jnp.exp(-h), approx=True)


def bnnet_kernel(x_ref, w1_ref, b1_ref, w2_ref, b2_ref, w3_ref, o_ref):
    """Fused: (matmul(+folded BN scale) -> +shift -> swish) x2 -> matmul."""
    # layer 1: conv1x1(784->H); BN scale pre-folded into w1, shift added here (f32 acc).
    h = jnp.dot(x_ref[...], w1_ref[...],
                preferred_element_type=jnp.float32) + b1_ref[...]
    h = _swish(h)

    # layer 2: conv1x1(H->H) + folded BN + Swish
    h = jnp.dot(h.astype(jnp.bfloat16), w2_ref[...],
                preferred_element_type=jnp.float32) + b2_ref[...]
    h = _swish(h)

    # layer 3: conv1x1(H -> C_PAD)  (extra class columns are zero weights)
    o_ref[...] = jnp.dot(h.astype(jnp.bfloat16), w3_ref[...],
                         preferred_element_type=jnp.float32).astype(o_ref.dtype)


@jax.jit
def bnnet_forward(x, kernel_params):
    """x: (B, 1, 28, 28) NCHW (anything reshaping to (B, 784)). Returns (B, C) f32."""
    b = x.shape[0]
    # cast once in the wrapper: bf16 activations halve the dominant HBM->VMEM traffic
    x2d = x.reshape(b, IN_FEATURES).astype(jnp.bfloat16)        # == x.view(B,784,1,1)

    tb = _pick_batch_tile(b)
    b_pad = _round_up(b, tb)
    if b_pad != b:
        # pad batch rows only (no K padding; no extra copy in the common divisible case)
        x_in = jnp.zeros((b_pad, IN_FEATURES), jnp.bfloat16).at[:b, :].set(x2d)
    else:
        x_in = x2d

    w1, b1, w2, b2, w3 = kernel_params

    out = pl.pallas_call(
        bnnet_kernel,
        out_shape=jax.ShapeDtypeStruct((b_pad, C_PAD), jnp.bfloat16),
        grid=(b_pad // tb,),
        in_specs=[
            pl.BlockSpec((tb, IN_FEATURES), lambda i: (i, 0)),      # activations: batch-tiled
            pl.BlockSpec((IN_FEATURES, HIDDEN), lambda i: (0, 0)),  # weights: VMEM-resident
            pl.BlockSpec((1, HIDDEN), lambda i: (0, 0)),
            pl.BlockSpec((HIDDEN, HIDDEN), lambda i: (0, 0)),
            pl.BlockSpec((1, HIDDEN), lambda i: (0, 0)),
            pl.BlockSpec((HIDDEN, C_PAD), lambda i: (0, 0)),
        ],
        out_specs=pl.BlockSpec((tb, C_PAD), lambda i: (i, 0)),
        compiler_params=pltpu.CompilerParams(
            dimension_semantics=("parallel",)),                     # megacore on v7x
    )(x_in, w1, b1, w2, b2, w3)

    return out[:b, :NUM_CLASSES].astype(jnp.float32)                # == .squeeze() for B>1


def make_params(key):
    """Raw f32 parameters (conv weights kaiming-ish, BN running stats)."""
    ks = jax.random.split(key, 10)

    def conv_w(k, c_out, c_in):
        # nn.Conv2d(c_in, c_out, 1) weight is (c_out, c_in, 1, 1); kaiming-uniform-ish.
        bound = 1.0 / np.sqrt(c_in)
        w = jax.random.uniform(k, (c_out, c_in), jnp.float32, -bound, bound)
        return w.T                                              # (c_in, c_out) for act @ W

    def bn_fold(kg, kb, km, kv, c):
        gamma = 1.0 + 0.1 * jax.random.normal(kg, (c,), jnp.float32)
        beta = 0.1 * jax.random.normal(kb, (c,), jnp.float32)
        running_mean = 0.1 * jax.random.normal(km, (c,), jnp.float32)
        running_var = jnp.abs(jax.random.normal(kv, (c,), jnp.float32)) + 0.5
        scale = gamma / jnp.sqrt(running_var + BN_EPS)
        shift = beta - running_mean * scale
        return scale.reshape(1, c), shift.reshape(1, c)

    w1 = conv_w(ks[0], HIDDEN, IN_FEATURES)                     # (784, H)
    s1, sh1 = bn_fold(ks[1], ks[2], ks[3], ks[4], HIDDEN)
    w2 = conv_w(ks[5], HIDDEN, HIDDEN)                          # (H, H)
    s2, sh2 = bn_fold(ks[6], ks[7], ks[8], ks[9], HIDDEN)       # distinct keys (no reuse)
    w3 = conv_w(jax.random.fold_in(key, 123), NUM_CLASSES, HIDDEN)  # (H, C)
    return (w1, s1, sh1, w2, s2, sh2, w3)


def fold_and_pack_params(raw_params):
    """Fold BN scale into conv weights, pad class dim to 128, cast weights to bf16."""
    w1, s1, sh1, w2, s2, sh2, w3 = raw_params
    w1f = w1 * s1                                               # scale per output channel
    w2f = w2 * s2
    w3p = jnp.zeros((HIDDEN, C_PAD), jnp.float32).at[:, :NUM_CLASSES].set(w3)
    return (w1f.astype(jnp.bfloat16), sh1.astype(jnp.float32),
            w2f.astype(jnp.bfloat16), sh2.astype(jnp.float32),
            w3p.astype(jnp.bfloat16))


def reference_forward(x, raw_params):
    """Pure-JAX f32 reference matching the PyTorch forward (eval-mode BN)."""
    w1, s1, sh1, w2, s2, sh2, w3 = raw_params
    h = x.reshape(x.shape[0], IN_FEATURES).astype(jnp.float32)
    h = h @ w1
    h = h * s1 + sh1
    h = h * jax.nn.sigmoid(h)
    h = h @ w2
    h = h * s2 + sh2
    h = h * jax.nn.sigmoid(h)
    return h @ w3


if __name__ == "__main__":
    key = jax.random.PRNGKey(0)
    kx, kp = jax.random.split(key)

    x = jax.random.normal(kx, (2, 1, 28, 28), jnp.float32)      # NCHW input, B=2
    raw_params = make_params(kp)
    kernel_params = fold_and_pack_params(raw_params)

    out = bnnet_forward(x, kernel_params)
    out = jax.block_until_ready(out)

    ref = reference_forward(x, raw_params)
    assert out.shape == (2, NUM_CLASSES), out.shape
    # bf16 MXU operands / bf16 output -> loosened tolerance vs. the f32 reference
    np.testing.assert_allclose(np.asarray(out), np.asarray(ref), rtol=5e-2, atol=5e-2)

    print("KERNEL_OK")
</pallas_src>

<mosaic_0001>
module attributes {stable_mosaic.version = 11 : i64} {
  func.func @bnnet_kernel(%arg0: i32, %arg1: memref<8x784xbf16, #tpu.memory_space<vmem>>, %arg2: memref<784x256xbf16, #tpu.memory_space<vmem>>, %arg3: memref<1x256xf32, #tpu.memory_space<vmem>>, %arg4: memref<256x256xbf16, #tpu.memory_space<vmem>>, %arg5: memref<1x256xf32, #tpu.memory_space<vmem>>, %arg6: memref<256x128xbf16, #tpu.memory_space<vmem>>, %arg7: memref<8x128xbf16, #tpu.memory_space<vmem>>) attributes {dimension_semantics = [#tpu.dimension_semantics<parallel>], iteration_bounds = array<i64: 1>, scalar_prefetch = 0 : i64, scratch_operands = 0 : i64, tpu.core_type = #tpu.core_type<tc>, window_params = [{transform_indices = @transform_0, window_bounds = array<i64: 8, 784>}, {pipeline_mode = #tpu.pipeline_mode<synchronous>, transform_indices = @transform_1, window_bounds = array<i64: 784, 256>}, {pipeline_mode = #tpu.pipeline_mode<synchronous>, transform_indices = @transform_2, window_bounds = array<i64: 1, 256>}, {pipeline_mode = #tpu.pipeline_mode<synchronous>, transform_indices = @transform_3, window_bounds = array<i64: 256, 256>}, {pipeline_mode = #tpu.pipeline_mode<synchronous>, transform_indices = @transform_4, window_bounds = array<i64: 1, 256>}, {pipeline_mode = #tpu.pipeline_mode<synchronous>, transform_indices = @transform_5, window_bounds = array<i64: 256, 128>}, {transform_indices = @transform_6, window_bounds = array<i64: 8, 128>}]} {
    %c0 = arith.constant 0 : index
    %c0_0 = arith.constant 0 : index
    %0 = vector.load %arg1[%c0, %c0_0] : memref<8x784xbf16, #tpu.memory_space<vmem>>, vector<8x784xbf16>
    %c0_1 = arith.constant 0 : index
    %c0_2 = arith.constant 0 : index
    %1 = vector.load %arg2[%c0_1, %c0_2] : memref<784x256xbf16, #tpu.memory_space<vmem>>, vector<784x256xbf16>
    %cst = arith.constant dense<0.000000e+00> : vector<8x256xf32>
    %2 = tpu.matmul %0, %1, %cst {dimension_numbers = #tpu.dot_dimension_numbers<[1], [0], [0], [1], [0, 0, 1, 1], [], []>} : vector<8x784xbf16>, vector<784x256xbf16>, vector<8x256xf32> -> vector<8x256xf32>
    %c0_3 = arith.constant 0 : index
    %c0_4 = arith.constant 0 : index
    %3 = vector.load %arg3[%c0_3, %c0_4] : memref<1x256xf32, #tpu.memory_space<vmem>>, vector<1x256xf32>
    %4 = vector.broadcast %3 : vector<1x256xf32> to vector<8x256xf32>
    %5 = arith.addf %2, %4 : vector<8x256xf32>
    %cst_5 = arith.constant 0.000000e+00 : f32
    %6 = vector.broadcast %cst_5 : f32 to vector<8x256xf32>
    %7 = arith.subf %6, %5 : vector<8x256xf32>
    %8 = math.exp %7 : vector<8x256xf32>
    %cst_6 = arith.constant 1.000000e+00 : f32
    %9 = vector.broadcast %cst_6 : f32 to vector<8x256xf32>
    %10 = arith.addf %9, %8 : vector<8x256xf32>
    %11 = tpu.reciprocal %10 {approx = true} : vector<8x256xf32> -> vector<8x256xf32>
    %12 = arith.mulf %5, %11 : vector<8x256xf32>
    %13 = arith.truncf %12 : vector<8x256xf32> to vector<8x256xbf16>
    %c0_7 = arith.constant 0 : index
    %c0_8 = arith.constant 0 : index
    %14 = vector.load %arg4[%c0_7, %c0_8] : memref<256x256xbf16, #tpu.memory_space<vmem>>, vector<256x256xbf16>
    %cst_9 = arith.constant dense<0.000000e+00> : vector<8x256xf32>
    %15 = tpu.matmul %13, %14, %cst_9 {dimension_numbers = #tpu.dot_dimension_numbers<[1], [0], [0], [1], [0, 0, 1, 1], [], []>} : vector<8x256xbf16>, vector<256x256xbf16>, vector<8x256xf32> -> vector<8x256xf32>
    %c0_10 = arith.constant 0 : index
    %c0_11 = arith.constant 0 : index
    %16 = vector.load %arg5[%c0_10, %c0_11] : memref<1x256xf32, #tpu.memory_space<vmem>>, vector<1x256xf32>
    %17 = vector.broadcast %16 : vector<1x256xf32> to vector<8x256xf32>
    %18 = arith.addf %15, %17 : vector<8x256xf32>
    %cst_12 = arith.constant 0.000000e+00 : f32
    %19 = vector.broadcast %cst_12 : f32 to vector<8x256xf32>
    %20 = arith.subf %19, %18 : vector<8x256xf32>
    %21 = math.exp %20 : vector<8x256xf32>
    %cst_13 = arith.constant 1.000000e+00 : f32
    %22 = vector.broadcast %cst_13 : f32 to vector<8x256xf32>
    %23 = arith.addf %22, %21 : vector<8x256xf32>
    %24 = tpu.reciprocal %23 {approx = true} : vector<8x256xf32> -> vector<8x256xf32>
    %25 = arith.mulf %18, %24 : vector<8x256xf32>
    %26 = arith.truncf %25 : vector<8x256xf32> to vector<8x256xbf16>
    %c0_14 = arith.constant 0 : index
    %c0_15 = arith.constant 0 : index
    %27 = vector.load %arg6[%c0_14, %c0_15] : memref<256x128xbf16, #tpu.memory_space<vmem>>, vector<256x128xbf16>
    %cst_16 = arith.constant dense<0.000000e+00> : vector<8x128xf32>
    %28 = tpu.matmul %26, %27, %cst_16 {dimension_numbers = #tpu.dot_dimension_numbers<[1], [0], [0], [1], [0, 0, 1, 1], [], []>} : vector<8x256xbf16>, vector<256x128xbf16>, vector<8x128xf32> -> vector<8x128xf32>
    %29 = arith.truncf %28 : vector<8x128xf32> to vector<8x128xbf16>
    %c0_17 = arith.constant 0 : index
    %c0_18 = arith.constant 0 : index
    %30 = vector.load %arg7[%c0_17, %c0_18] : memref<8x128xbf16, #tpu.memory_space<vmem>>, vector<8x128xbf16>
    tpu.vector_store %arg7[%c0_17, %c0_18], %29 {strides = array<i32>} : memref<8x128xbf16, #tpu.memory_space<vmem>>, vector<8x128xbf16>,
    return
  }
  func.func @transform_0(%arg0: i32) -> (i32, i32) {
    %c0_i32 = arith.constant 0 : i32
    %c0_i32_0 = arith.constant 0 : i32
    return %arg0, %c0_i32 : i32, i32
  }
  func.func @transform_1(%arg0: i32) -> (i32, i32) {
    %c0_i32 = arith.constant 0 : i32
    %c0_i32_0 = arith.constant 0 : i32
    %c0_i32_1 = arith.constant 0 : i32
    return %c0_i32, %c0_i32_0 : i32, i32
  }
  func.func @transform_2(%arg0: i32) -> (i32, i32) {
    %c0_i32 = arith.constant 0 : i32
    %c0_i32_0 = arith.constant 0 : i32
    %c0_i32_1 = arith.constant 0 : i32
    return %c0_i32, %c0_i32_0 : i32, i32
  }
  func.func @transform_3(%arg0: i32) -> (i32, i32) {
    %c0_i32 = arith.constant 0 : i32
    %c0_i32_0 = arith.constant 0 : i32
    %c0_i32_1 = arith.constant 0 : i32
    return %c0_i32, %c0_i32_0 : i32, i32
  }
  func.func @transform_4(%arg0: i32) -> (i32, i32) {
    %c0_i32 = arith.constant 0 : i32
    %c0_i32_0 = arith.constant 0 : i32
    %c0_i32_1 = arith.constant 0 : i32
    return %c0_i32, %c0_i32_0 : i32, i32
  }
  func.func @transform_5(%arg0: i32) -> (i32, i32) {
    %c0_i32 = arith.constant 0 : i32
    %c0_i32_0 = arith.constant 0 : i32
    %c0_i32_1 = arith.constant 0 : i32
    return %c0_i32, %c0_i32_0 : i32, i32
  }
  func.func @transform_6(%arg0: i32) -> (i32, i32) {
    %c0_i32 = arith.constant 0 : i32
    %c0_i32_0 = arith.constant 0 : i32
    return %arg0, %c0_i32 : i32, i32
  }
}

</mosaic_0001>

<llo_original>
// kernel: bnnet_forward.1
$region0: #{bnnet_forward.1}
  #allocation0 [shape = 'u32[]', space=smem, size = 0x4, offset = 0x4, fixed_abs, tag = 'smem constant byte address 0x4 - core index']
  #allocation1 [shape = 'u32[144,128]{1,0:T(1,128)}', space=vmem, size = 0x12000, scoped, tag = 'internal scratch']
  %s0 = inlined_call_operand.vmem [shape: bf16[8,784], index: 0, kind: input, shape index: {}]
  %s1 = inlined_call_operand.hbm [shape: bf16[784,256], index: 1, kind: input, shape index: {}]
  %s2 = inlined_call_operand.vmem [shape: f32[1,256], index: 2, kind: input, shape index: {}]
  %s3 = inlined_call_operand.hbm [shape: bf16[256,256], index: 3, kind: input, shape index: {}]
  %s4 = inlined_call_operand.vmem [shape: f32[1,256], index: 4, kind: input, shape index: {}]
  %s5 = inlined_call_operand.vmem [shape: bf16[256,128], index: 5, kind: input, shape index: {}]
  %s6 = inlined_call_operand.vmem [shape: bf16[8,128], index: 6, kind: output, shape index: {}]
  %s7 = sld [smem:[#allocation0]]
  $region42: #{bnnet_forward.1} parent=0
    _
  %s9 = ssub.s32 1, %s7
  %s10 = scalar_select 0, %s9, %s7
  $region1: #{bnnet_forward.1} parent=0
    #allocation2 [shape = 'u8[401408]{0}', space=vmem, size = 0x62000, scoped, tag = 'input window, operand 1, single buffered']
    #allocation3 [shape = 's32[1]{0}', space=sflag, size = 0x4, scoped, tag = 'scoped memory for bnnet_forward.1']
    #allocation4 [shape = 'u8[131072]{0}', space=vmem, size = 0x20000, scoped, tag = 'input window, operand 3, single buffered']
    #allocation5 [shape = 's32[1]{0}', space=sflag, size = 0x4, scoped, tag = 'scoped memory for bnnet_forward.1']
    %11 = vsyncpa [#allocation3], 0
    %12 = vsyncpa [#allocation5], 0
    // Predicated region
    $region2: #{bnnet_forward.1} parent=1 // pred_check
      _
    $region3: #{bnnet_forward.1} parent=1 // pred_check_branch
      %14 = sbr.rel (0) target = $region5
    $region4: #{bnnet_forward.1} parent=1 // pred_region
      _
    $region5: #{bnnet_forward.1} parent=1 // pred_fallthru
      _
    // Predicated region
    $region6: #{bnnet_forward.1} parent=1 // pred_check
      _
    $region7: #{bnnet_forward.1} parent=1 // pred_check_branch
      %16 = sbr.rel (0) target = $region9
    $region8: #{bnnet_forward.1} parent=1 // pred_region
      %s18 = ssub.s32 12544, 12544
      %19 = vsyncadd [#allocation3], %s18
      %s20 = sshll.u32 [#allocation2], 4
      %s21 = int_to_ptr.vmem [resolvable:$true] %s20
      %26 = dma.hbm_to_vmem [thread:$0]  %s1, 12544, %s21, [#allocation3], 128, 128, 8
    $region9: #{bnnet_forward.1} parent=1 // pred_fallthru
      _
    // Predicated region
    $region10: #{bnnet_forward.1} parent=1 // pred_check
      _
    $region11: #{bnnet_forward.1} parent=1 // pred_check_branch
      %28 = sbr.rel (0) target = $region13
    $region12: #{bnnet_forward.1} parent=1 // pred_region
      _
    $region13: #{bnnet_forward.1} parent=1 // pred_fallthru
      _
    // Predicated region
    $region14: #{bnnet_forward.1} parent=1 // pred_check
      _
    $region15: #{bnnet_forward.1} parent=1 // pred_check_branch
      %30 = sbr.rel (0) target = $region17
    $region16: #{bnnet_forward.1} parent=1 // pred_region
      %s32 = ssub.s32 4096, 4096
      %33 = vsyncadd [#allocation5], %s32
      %s34 = sshll.u32 [#allocation4], 4
      %s35 = int_to_ptr.vmem [resolvable:$true] %s34
      %40 = dma.hbm_to_vmem [thread:$0]  %s3, 4096, %s35, [#allocation5], 128, 128, 8
    $region17: #{bnnet_forward.1} parent=1 // pred_fallthru
      _
    // Predicated region
    $region18: #{bnnet_forward.1} parent=1 // pred_check
      _
    $region19: #{bnnet_forward.1} parent=1 // pred_check_branch
      %42 = sbr.rel (0) target = $region21
    $region20: #{bnnet_forward.1} parent=1 // pred_region
      _
    $region21: #{bnnet_forward.1} parent=1 // pred_fallthru
      _
    // Predicated region
    $region22: #{bnnet_forward.1} parent=1 // pred_check
      _
    $region23: #{bnnet_forward.1} parent=1 // pred_check_branch
      %44 = sbr.rel (0) target = $region25
    $region24: #{bnnet_forward.1} parent=1 // pred_region
      _
    $region25: #{bnnet_forward.1} parent=1 // pred_fallthru
      _
    // Predicated region
    $region26: #{bnnet_forward.1} parent=1 // pred_check
      _
    $region27: #{bnnet_forward.1} parent=1 // pred_check_branch
      %46 = sbr.rel (0) target = $region29
    $region28: #{bnnet_forward.1} parent=1 // pred_region
      %47 = dma.done [#allocation3], 12544
    $region29: #{bnnet_forward.1} parent=1 // pred_fallthru
      _
    // Predicated region
    $region30: #{bnnet_forward.1} parent=1 // pred_check
      _
    $region31: #{bnnet_forward.1} parent=1 // pred_check_branch
      %49 = sbr.rel (0) target = $region33
    $region32: #{bnnet_forward.1} parent=1 // pred_region
      %50 = dma.done [#allocation5], 4096
    $region33: #{bnnet_forward.1} parent=1 // pred_fallthru
      _
    %v52 = vld [vmem:[%s0] sm:$0xff]
    %v53 = vld [vmem:[%s0 + $0x8] sm:$0xff]
    %v54 = vld [vmem:[%s0 + $0x10] sm:$0xff]
    %v55 = vld [vmem:[%s0 + $0x18] sm:$0xf]
    %v56 = vld [vmem:[#allocation2] sm:$0xff]
    %v57 = vld [vmem:[#allocation2 + $0x8] sm:$0xff]
    %v58 = vld [vmem:[#allocation2 + $0x10] sm:$0xff]
    %v59 = vld [vmem:[#allocation2 + $0x18] sm:$0xff]
    %v60 = vld [vmem:[#allocation2 + $0x20] sm:$0xff]
    %v61 = vld [vmem:[#allocation2 + $0x28] sm:$0xff]
    %v62 = vld [vmem:[#allocation2 + $0x30] sm:$0xff]
    %v63 = vld [vmem:[#allocation2 + $0x38] sm:$0xff]
    %v64 = vld [vmem:[#allocation2 + $0x40] sm:$0xff]
    %v65 = vld [vmem:[#allocation2 + $0x48] sm:$0xff]
    %v66 = vld [vmem:[#allocation2 + $0x50] sm:$0xff]
    %v67 = vld [vmem:[#allocation2 + $0x58] sm:$0xff]
    %v68 = vld [vmem:[#allocation2 + $0x60] sm:$0xff]
    %v69 = vld [vmem:[#allocation2 + $0x68] sm:$0xff]
    %v70 = vld [vmem:[#allocation2 + $0x70] sm:$0xff]
    %v71 = vld [vmem:[#allocation2 + $0x78] sm:$0xff]
    %v72 = vld [vmem:[#allocation2 + $0x80] sm:$0xff]
    %v73 = vld [vmem:[#allocation2 + $0x88] sm:$0xff]
    %v74 = vld [vmem:[#allocation2 + $0x90] sm:$0xff]
    %v75 = vld [vmem:[#allocation2 + $0x98] sm:$0xff]
    %v76 = vld [vmem:[#allocation2 + $0xa0] sm:$0xff]
    %v77 = vld [vmem:[#allocation2 + $0xa8] sm:$0xff]
    %v78 = vld [vmem:[#allocation2 + $0xb0] sm:$0xff]
    %v79 = vld [vmem:[#allocation2 + $0xb8] sm:$0xff]
    %v80 = vld [vmem:[#allocation2 + $0xc0] sm:$0xff]
    %v81 = vld [vmem:[#allocation2 + $0xc8] sm:$0xff]
    %v82 = vld [vmem:[#allocation2 + $0xd0] sm:$0xff]
    %v83 = vld [vmem:[#allocation2 + $0xd8] sm:$0xff]
    %v84 = vld [vmem:[#allocation2 + $0xe0] sm:$0xff]
    %v85 = vld [vmem:[#allocation2 + $0xe8] sm:$0xff]
    %v86 = vld [vmem:[#allocation2 + $0xf0] sm:$0xff]
    %v87 = vld [vmem:[#allocation2 + $0xf8] sm:$0xff]
    %v88 = vld [vmem:[#allocation2 + $0x100] sm:$0xff]
    %v89 = vld [vmem:[#allocation2 + $0x108] sm:$0xff]
    %v90 = vld [vmem:[#allocation2 + $0x110] sm:$0xff]
    %v91 = vld [vmem:[#allocation2 + $0x118] sm:$0xff]
    %v92 = vld [vmem:[#allocation2 + $0x120] sm:$0xff]
    %v93 = vld [vmem:[#allocation2 + $0x128] sm:$0xff]
    %v94 = vld [vmem:[#allocation2 + $0x130] sm:$0xff]
    %v95 = vld [vmem:[#allocation2 + $0x138] sm:$0xff]
    %v96 = vld [vmem:[#allocation2 + $0x140] sm:$0xff]
    %v97 = vld [vmem:[#allocation2 + $0x148] sm:$0xff]
    %v98 = vld [vmem:[#allocation2 + $0x150] sm:$0xff]
    %v99 = vld [vmem:[#allocation2 + $0x158] sm:$0xff]
    %v100 = vld [vmem:[#allocation2 + $0x160] sm:$0xff]
    %v101 = vld [vmem:[#allocation2 + $0x168] sm:$0xff]
    %v102 = vld [vmem:[#allocation2 + $0x170] sm:$0xff]
    %v103 = vld [vmem:[#allocation2 + $0x178] sm:$0xff]
    %v104 = vld [vmem:[#allocation2 + $0x180] sm:$0xff]
    %v105 = vld [vmem:[#allocation2 + $0x188] sm:$0xff]
    %v106 = vld [vmem:[#allocation2 + $0x190] sm:$0xff]
    %v107 = vld [vmem:[#allocation2 + $0x198] sm:$0xff]
    %v108 = vld [vmem:[#allocation2 + $0x1a0] sm:$0xff]
    %v109 = vld [vmem:[#allocation2 + $0x1a8] sm:$0xff]
    %v110 = vld [vmem:[#allocation2 + $0x1b0] sm:$0xff]
    %v111 = vld [vmem:[#allocation2 + $0x1b8] sm:$0xff]
    %v112 = vld [vmem:[#allocation2 + $0x1c0] sm:$0xff]
    %v113 = vld [vmem:[#allocation2 + $0x1c8] sm:$0xff]
    %v114 = vld [vmem:[#allocation2 + $0x1d0] sm:$0xff]
    %v115 = vld [vmem:[#allocation2 + $0x1d8] sm:$0xff]
    %v116 = vld [vmem:[#allocation2 + $0x1e0] sm:$0xff]
    %v117 = vld [vmem:[#allocation2 + $0x1e8] sm:$0xff]
    %v118 = vld [vmem:[#allocation2 + $0x1f0] sm:$0xff]
    %v119 = vld [vmem:[#allocation2 + $0x1f8] sm:$0xff]
    %v120 = vld [vmem:[#allocation2 + $0x200] sm:$0xff]
    %v121 = vld [vmem:[#allocation2 + $0x208] sm:$0xff]
    %v122 = vld [vmem:[#allocation2 + $0x210] sm:$0xff]
    %v123 = vld [vmem:[#allocation2 + $0x218] sm:$0xff]
    %v124 = vld [vmem:[#allocation2 + $0x220] sm:$0xff]
    %v125 = vld [vmem:[#allocation2 + $0x228] sm:$0xff]
    %v126 = vld [vmem:[#allocation2 + $0x230] sm:$0xff]
    %v127 = vld [vmem:[#allocation2 + $0x238] sm:$0xff]
    %v128 = vld [vmem:[#allocation2 + $0x240] sm:$0xff]
    %v129 = vld [vmem:[#allocation2 + $0x248] sm:$0xff]
    %v130 = vld [vmem:[#allocation2 + $0x250] sm:$0xff]
    %v131 = vld [vmem:[#allocation2 + $0x258] sm:$0xff]
    %v132 = vld [vmem:[#allocation2 + $0x260] sm:$0xff]
    %v133 = vld [vmem:[#allocation2 + $0x268] sm:$0xff]
    %v134 = vld [vmem:[#allocation2 + $0x270] sm:$0xff]
    %v135 = vld [vmem:[#allocation2 + $0x278] sm:$0xff]
    %v136 = vld [vmem:[#allocation2 + $0x280] sm:$0xff]
    %v137 = vld [vmem:[#allocation2 + $0x288] sm:$0xff]
    %v138 = vld [vmem:[#allocation2 + $0x290] sm:$0xff]
    %v139 = vld [vmem:[#allocation2 + $0x298] sm:$0xff]
    %v140 = vld [vmem:[#allocation2 + $0x2a0] sm:$0xff]
    %v141 = vld [vmem:[#allocation2 + $0x2a8] sm:$0xff]
    %v142 = vld [vmem:[#allocation2 + $0x2b0] sm:$0xff]
    %v143 = vld [vmem:[#allocation2 + $0x2b8] sm:$0xff]
    %v144 = vld [vmem:[#allocation2 + $0x2c0] sm:$0xff]
    %v145 = vld [vmem:[#allocation2 + $0x2c8] sm:$0xff]
    %v146 = vld [vmem:[#allocation2 + $0x2d0] sm:$0xff]
    %v147 = vld [vmem:[#allocation2 + $0x2d8] sm:$0xff]
    %v148 = vld [vmem:[#allocation2 + $0x2e0] sm:$0xff]
    %v149 = vld [vmem:[#allocation2 + $0x2e8] sm:$0xff]
    %v150 = vld [vmem:[#allocation2 + $0x2f0] sm:$0xff]
    %v151 = vld [vmem:[#allocation2 + $0x2f8] sm:$0xff]
    %v152 = vld [vmem:[#allocation2 + $0x300] sm:$0xff]
    %v153 = vld [vmem:[#allocation2 + $0x308] sm:$0xff]
    %v154 = vld [vmem:[%s2] sm:$0x3]
    %v156 = vlaneseq
    %v157 = vshrl.u32 %v156, 7
    %v158 = vsub.s32 0, %v157
    %v159 = vrot.slane %v154, %v158
    %v160 = vlaneseq
    %v161 = vshrl.u32 %v160, 7
    %v162 = vsub.s32 1, %v161
    %v163 = vrot.slane %v154, %v162
    %v170 = vunpack.c.l.b16 %v52
    %v171 = vunpack.c.h.b16 %v52
    %v172 = vunpack.c.l.b16 %v53
    %v173 = vunpack.c.h.b16 %v53
    %v174 = vunpack.c.l.b16 %v54
    %v175 = vunpack.c.h.b16 %v54
    %v176 = vunpack.c.l.b16 %v55
    %v177 = vpack.c.b16 %v170, %v170
    %v178 = vpack.c.b16 %v171, %v171
    %v179 = vpack.c.b16 %v172, %v172
    %v180 = vpack.c.b16 %v173, %v173
    %v181 = vpack.c.b16 %v174, %v174
    %v182 = vpack.c.b16 %v175, %v175
    %v183 = vpack.c.b16 %v176, %v176
    %v288 = vunpack.c.l.b16 %v56
    %v289 = vunpack.c.h.b16 %v56
    %v290 = vunpack.c.l.b16 %v57
    %v291 = vunpack.c.h.b16 %v57
    %v292 = vunpack.c.l.b16 %v58
    %v293 = vunpack.c.h.b16 %v58
    %v294 = vunpack.c.l.b16 %v59
    %v295 = vunpack.c.h.b16 %v59
    %v296 = vunpack.c.l.b16 %v60
    %v297 = vunpack.c.h.b16 %v60
    %v298 = vunpack.c.l.b16 %v61
    %v299 = vunpack.c.h.b16 %v61
    %v300 = vunpack.c.l.b16 %v62
    %v301 = vunpack.c.h.b16 %v62
    %v302 = vunpack.c.l.b16 %v63
    %v303 = vunpack.c.h.b16 %v63
    %v304 = vunpack.c.l.b16 %v64
    %v305 = vunpack.c.h.b16 %v64
    %v306 = vunpack.c.l.b16 %v65
    %v307 = vunpack.c.h.b16 %v65
    %v308 = vunpack.c.l.b16 %v66
    %v309 = vunpack.c.h.b16 %v66
    %v310 = vunpack.c.l.b16 %v67
    %v311 = vunpack.c.h.b16 %v67
    %v312 = vunpack.c.l.b16 %v68
    %v313 = vunpack.c.h.b16 %v68
    %v314 = vunpack.c.l.b16 %v69
    %v315 = vunpack.c.h.b16 %v69
    %v316 = vunpack.c.l.b16 %v70
    %v317 = vunpack.c.h.b16 %v70
    %v318 = vunpack.c.l.b16 %v71
    %v319 = vunpack.c.h.b16 %v71
    %v320 = vunpack.c.l.b16 %v72
    %v321 = vunpack.c.h.b16 %v72
    %v322 = vunpack.c.l.b16 %v73
    %v323 = vunpack.c.h.b16 %v73
    %v324 = vunpack.c.l.b16 %v74
    %v325 = vunpack.c.h.b16 %v74
    %v326 = vunpack.c.l.b16 %v75
    %v327 = vunpack.c.h.b16 %v75
    %v328 = vunpack.c.l.b16 %v76
    %v329 = vunpack.c.h.b16 %v76
    %v330 = vunpack.c.l.b16 %v77
    %v331 = vunpack.c.h.b16 %v77
    %v332 = vunpack.c.l.b16 %v78
    %v333 = vunpack.c.h.b16 %v78
    %v334 = vunpack.c.l.b16 %v79
    %v335 = vunpack.c.h.b16 %v79
    %v336 = vunpack.c.l.b16 %v80
    %v337 = vunpack.c.h.b16 %v80
    %v338 = vunpack.c.l.b16 %v81
    %v339 = vunpack.c.h.b16 %v81
    %v340 = vunpack.c.l.b16 %v82
    %v341 = vunpack.c.h.b16 %v82
    %v342 = vunpack.c.l.b16 %v83
    %v343 = vunpack.c.h.b16 %v83
    %v344 = vunpack.c.l.b16 %v84
    %v345 = vunpack.c.h.b16 %v84
    %v346 = vunpack.c.l.b16 %v85
    %v347 = vunpack.c.h.b16 %v85
    %v348 = vunpack.c.l.b16 %v86
    %v349 = vunpack.c.h.b16 %v86
    %v350 = vunpack.c.l.b16 %v87
    %v351 = vunpack.c.h.b16 %v87
    %v352 = vunpack.c.l.b16 %v88
    %v353 = vunpack.c.h.b16 %v88
    %v354 = vunpack.c.l.b16 %v89
    %v355 = vunpack.c.h.b16 %v89
    %v356 = vunpack.c.l.b16 %v90
    %v357 = vunpack.c.h.b16 %v90
    %v358 = vunpack.c.l.b16 %v91
    %v359 = vunpack.c.h.b16 %v91
    %v360 = vunpack.c.l.b16 %v92
    %v361 = vunpack.c.h.b16 %v92
    %v362 = vunpack.c.l.b16 %v93
    %v363 = vunpack.c.h.b16 %v93
    %v364 = vunpack.c.l.b16 %v94
    %v365 = vunpack.c.h.b16 %v94
    %v366 = vunpack.c.l.b16 %v95
    %v367 = vunpack.c.h.b16 %v95
    %v368 = vunpack.c.l.b16 %v96
    %v369 = vunpack.c.h.b16 %v96
    %v370 = vunpack.c.l.b16 %v97
    %v371 = vunpack.c.h.b16 %v97
    %v372 = vunpack.c.l.b16 %v98
    %v373 = vunpack.c.h.b16 %v98
    %v374 = vunpack.c.l.b16 %v99
    %v375 = vunpack.c.h.b16 %v99
    %v376 = vunpack.c.l.b16 %v100
    %v377 = vunpack.c.h.b16 %v100
    %v378 = vunpack.c.l.b16 %v101
    %v379 = vunpack.c.h.b16 %v101
    %v380 = vunpack.c.l.b16 %v102
    %v381 = vunpack.c.h.b16 %v102
    %v382 = vunpack.c.l.b16 %v103
    %v383 = vunpack.c.h.b16 %v103
    %v384 = vunpack.c.l.b16 %v104
    %v385 = vunpack.c.h.b16 %v104
    %v386 = vunpack.c.l.b16 %v105
    %v387 = vunpack.c.h.b16 %v105
    %v388 = vunpack.c.l.b16 %v106
    %v389 = vunpack.c.h.b16 %v106
    %v390 = vunpack.c.l.b16 %v107
    %v391 = vunpack.c.h.b16 %v107
    %v392 = vunpack.c.l.b16 %v108
    %v393 = vunpack.c.h.b16 %v108
    %v394 = vunpack.c.l.b16 %v109
    %v395 = vunpack.c.h.b16 %v109
    %v396 = vunpack.c.l.b16 %v110
    %v397 = vunpack.c.h.b16 %v110
    %v398 = vunpack.c.l.b16 %v111
    %v399 = vunpack.c.h.b16 %v111
    %v400 = vunpack.c.l.b16 %v112
    %v401 = vunpack.c.h.b16 %v112
    %v402 = vunpack.c.l.b16 %v113
    %v403 = vunpack.c.h.b16 %v113
    %v404 = vunpack.c.l.b16 %v114
    %v405 = vunpack.c.h.b16 %v114
    %v406 = vunpack.c.l.b16 %v115
    %v407 = vunpack.c.h.b16 %v115
    %v408 = vunpack.c.l.b16 %v116
    %v409 = vunpack.c.h.b16 %v116
    %v410 = vunpack.c.l.b16 %v117
    %v411 = vunpack.c.h.b16 %v117
    %v412 = vunpack.c.l.b16 %v118
    %v413 = vunpack.c.h.b16 %v118
    %v414 = vunpack.c.l.b16 %v119
    %v415 = vunpack.c.h.b16 %v119
    %v416 = vunpack.c.l.b16 %v120
    %v417 = vunpack.c.h.b16 %v120
    %v418 = vunpack.c.l.b16 %v121
    %v419 = vunpack.c.h.b16 %v121
    %v420 = vunpack.c.l.b16 %v122
    %v421 = vunpack.c.h.b16 %v122
    %v422 = vunpack.c.l.b16 %v123
    %v423 = vunpack.c.h.b16 %v123
    %v424 = vunpack.c.l.b16 %v124
    %v425 = vunpack.c.h.b16 %v124
    %v426 = vunpack.c.l.b16 %v125
    %v427 = vunpack.c.h.b16 %v125
    %v428 = vunpack.c.l.b16 %v126
    %v429 = vunpack.c.h.b16 %v126
    %v430 = vunpack.c.l.b16 %v127
    %v431 = vunpack.c.h.b16 %v127
    %v432 = vunpack.c.l.b16 %v128
    %v433 = vunpack.c.h.b16 %v128
    %v434 = vunpack.c.l.b16 %v129
    %v435 = vunpack.c.h.b16 %v129
    %v436 = vunpack.c.l.b16 %v130
    %v437 = vunpack.c.h.b16 %v130
    %v438 = vunpack.c.l.b16 %v131
    %v439 = vunpack.c.h.b16 %v131
    %v440 = vunpack.c.l.b16 %v132
    %v441 = vunpack.c.h.b16 %v132
    %v442 = vunpack.c.l.b16 %v133
    %v443 = vunpack.c.h.b16 %v133
    %v444 = vunpack.c.l.b16 %v134
    %v445 = vunpack.c.h.b16 %v134
    %v446 = vunpack.c.l.b16 %v135
    %v447 = vunpack.c.h.b16 %v135
    %v448 = vunpack.c.l.b16 %v136
    %v449 = vunpack.c.h.b16 %v136
    %v450 = vunpack.c.l.b16 %v137
    %v451 = vunpack.c.h.b16 %v137
    %v452 = vunpack.c.l.b16 %v138
    %v453 = vunpack.c.h.b16 %v138
    %v454 = vunpack.c.l.b16 %v139
    %v455 = vunpack.c.h.b16 %v139
    %v456 = vunpack.c.l.b16 %v140
    %v457 = vunpack.c.h.b16 %v140
    %v458 = vunpack.c.l.b16 %v141
    %v459 = vunpack.c.h.b16 %v141
    %v460 = vunpack.c.l.b16 %v142
    %v461 = vunpack.c.h.b16 %v142
    %v462 = vunpack.c.l.b16 %v143
    %v463 = vunpack.c.h.b16 %v143
    %v464 = vunpack.c.l.b16 %v144
    %v465 = vunpack.c.h.b16 %v144
    %v466 = vunpack.c.l.b16 %v145
    %v467 = vunpack.c.h.b16 %v145
    %v468 = vunpack.c.l.b16 %v146
    %v469 = vunpack.c.h.b16 %v146
    %v470 = vunpack.c.l.b16 %v147
    %v471 = vunpack.c.h.b16 %v147
    %v472 = vunpack.c.l.b16 %v148
    %v473 = vunpack.c.h.b16 %v148
    %v474 = vunpack.c.l.b16 %v149
    %v475 = vunpack.c.h.b16 %v149
    %v476 = vunpack.c.l.b16 %v150
    %v477 = vunpack.c.h.b16 %v150
    %v478 = vunpack.c.l.b16 %v151
    %v479 = vunpack.c.h.b16 %v151
    %v480 = vunpack.c.l.b16 %v152
    %v481 = vunpack.c.h.b16 %v152
    %v482 = vunpack.c.l.b16 %v153
    %v483 = vunpack.c.h.b16 %v153
    %v484 = vpack.c.b16 %v290, %v288
    %v485 = vpack.c.b16 %v291, %v289
    %v486 = vpack.c.b16 %v294, %v292
    %v487 = vpack.c.b16 %v295, %v293
    %v488 = vpack.c.b16 %v298, %v296
    %v489 = vpack.c.b16 %v299, %v297
    %v490 = vpack.c.b16 %v302, %v300
    %v491 = vpack.c.b16 %v303, %v301
    %v492 = vpack.c.b16 %v306, %v304
    %v493 = vpack.c.b16 %v307, %v305
    %v494 = vpack.c.b16 %v310, %v308
    %v495 = vpack.c.b16 %v311, %v309
    %v496 = vpack.c.b16 %v314, %v312
    %v497 = vpack.c.b16 %v315, %v313
    %v498 = vpack.c.b16 %v318, %v316
    %v499 = vpack.c.b16 %v319, %v317
    %v500 = vpack.c.b16 %v322, %v320
    %v501 = vpack.c.b16 %v323, %v321
    %v502 = vpack.c.b16 %v326, %v324
    %v503 = vpack.c.b16 %v327, %v325
    %v504 = vpack.c.b16 %v330, %v328
    %v505 = vpack.c.b16 %v331, %v329
    %v506 = vpack.c.b16 %v334, %v332
    %v507 = vpack.c.b16 %v335, %v333
    %v508 = vpack.c.b16 %v338, %v336
    %v509 = vpack.c.b16 %v339, %v337
    %v510 = vpack.c.b16 %v342, %v340
    %v511 = vpack.c.b16 %v343, %v341
    %v512 = vpack.c.b16 %v346, %v344
    %v513 = vpack.c.b16 %v347, %v345
    %v514 = vpack.c.b16 %v350, %v348
    %v515 = vpack.c.b16 %v351, %v349
    %v516 = vpack.c.b16 %v354, %v352
    %v517 = vpack.c.b16 %v355, %v353
    %v518 = vpack.c.b16 %v358, %v356
    %v519 = vpack.c.b16 %v359, %v357
    %v520 = vpack.c.b16 %v362, %v360
    %v521 = vpack.c.b16 %v363, %v361
    %v522 = vpack.c.b16 %v366, %v364
    %v523 = vpack.c.b16 %v367, %v365
    %v524 = vpack.c.b16 %v370, %v368
    %v525 = vpack.c.b16 %v371, %v369
    %v526 = vpack.c.b16 %v374, %v372
    %v527 = vpack.c.b16 %v375, %v373
    %v528 = vpack.c.b16 %v378, %v376
    %v529 = vpack.c.b16 %v379, %v377
    %v530 = vpack.c.b16 %v382, %v380
    %v531 = vpack.c.b16 %v383, %v381
    %v532 = vpack.c.b16 %v386, %v384
    %v533 = vpack.c.b16 %v387, %v385
    %v534 = vpack.c.b16 %v390, %v388
    %v535 = vpack.c.b16 %v391, %v389
    %v536 = vpack.c.b16 %v394, %v392
    %v537 = vpack.c.b16 %v395, %v393
    %v538 = vpack.c.b16 %v398, %v396
    %v539 = vpack.c.b16 %v399, %v397
    %v540 = vpack.c.b16 %v402, %v400
    %v541 = vpack.c.b16 %v403, %v401
    %v542 = vpack.c.b16 %v406, %v404
    %v543 = vpack.c.b16 %v407, %v405
    %v544 = vpack.c.b16 %v410, %v408
    %v545 = vpack.c.b16 %v411, %v409
    %v546 = vpack.c.b16 %v414, %v412
    %v547 = vpack.c.b16 %v415, %v413
    %v548 = vpack.c.b16 %v418, %v416
    %v549 = vpack.c.b16 %v419, %v417
    %v550 = vpack.c.b16 %v422, %v420
    %v551 = vpack.c.b16 %v423, %v421
    %v552 = vpack.c.b16 %v426, %v424
    %v553 = vpack.c.b16 %v427, %v425
    %v554 = vpack.c.b16 %v430, %v428
    %v555 = vpack.c.b16 %v431, %v429
    %v556 = vpack.c.b16 %v434, %v432
    %v557 = vpack.c.b16 %v435, %v433
    %v558 = vpack.c.b16 %v438, %v436
    %v559 = vpack.c.b16 %v439, %v437
    %v560 = vpack.c.b16 %v442, %v440
    %v561 = vpack.c.b16 %v443, %v441
    %v562 = vpack.c.b16 %v446, %v444
    %v563 = vpack.c.b16 %v447, %v445
    %v564 = vpack.c.b16 %v450, %v448
    %v565 = vpack.c.b16 %v451, %v449
    %v566 = vpack.c.b16 %v454, %v452
    %v567 = vpack.c.b16 %v455, %v453
    %v568 = vpack.c.b16 %v458, %v456
    %v569 = vpack.c.b16 %v459, %v457
    %v570 = vpack.c.b16 %v462, %v460
    %v571 = vpack.c.b16 %v463, %v461
    %v572 = vpack.c.b16 %v466, %v464
    %v573 = vpack.c.b16 %v467, %v465
    %v574 = vpack.c.b16 %v470, %v468
    %v575 = vpack.c.b16 %v471, %v469
    %v576 = vpack.c.b16 %v474, %v472
    %v577 = vpack.c.b16 %v475, %v473
    %v578 = vpack.c.b16 %v478, %v476
    %v579 = vpack.c.b16 %v479, %v477
    %v580 = vpack.c.b16 %v482, %v480
    %v581 = vpack.c.b16 %v483, %v481
    %vm680 = vcmask 130048
    %v682 = vsel %vm680, %v183, 0
    %684 = vmatprep.subr.bf16.mxu0 %v499
    %685 = vmatpush1.bf16.msra.mxu0 %v498
    %686 = vmatprep.subr.bf16.mxu0 %v497
    %687 = vmatpush1.bf16.msra.mxu0 %v496
    %688 = vmatprep.subr.bf16.mxu0 %v495
    %689 = vmatpush1.bf16.msra.mxu0 %v494
    %690 = vmatprep.subr.bf16.mxu0 %v493
    %691 = vmatpush1.bf16.msra.mxu0 %v492
    %692 = vmatprep.subr.bf16.mxu0 %v491
    %693 = vmatpush1.bf16.msra.mxu0 %v490
    %694 = vmatprep.subr.bf16.mxu0 %v489
    %695 = vmatpush1.bf16.msra.mxu0 %v488
    %696 = vmatprep.subr.bf16.mxu0 %v487
    %697 = vmatpush1.bf16.msra.mxu0 %v486
    %698 = vmatprep.subr.bf16.mxu0 %v485
    %699 = vmatpush1.bf16.msra.mxu0 %v484
    %700 = vmatprep.subr.bf16.mxu0 %v515
    %701 = vmatpush2.bf16.msra.mxu0 %v514
    %702 = vmatprep.subr.bf16.mxu0 %v513
    %703 = vmatpush2.bf16.msra.mxu0 %v512
    %704 = vmatprep.subr.bf16.mxu0 %v511
    %705 = vmatpush2.bf16.msra.mxu0 %v510
    %706 = vmatprep.subr.bf16.mxu0 %v509
    %707 = vmatpush2.bf16.msra.mxu0 %v508
    %708 = vmatprep.subr.bf16.mxu0 %v507
    %709 = vmatpush2.bf16.msra.mxu0 %v506
    %710 = vmatprep.subr.bf16.mxu0 %v505
    %711 = vmatpush2.bf16.msra.mxu0 %v504
    %712 = vmatprep.subr.bf16.mxu0 %v503
    %713 = vmatpush2.bf16.msra.mxu0 %v502
    %714 = vmatprep.subr.bf16.mxu0 %v501
    %715 = vmatpush2.bf16.msra.mxu0 %v500
    %716 = vmatprep.mubr.bf16.mxu0 %v178
    %717 = vmatmul.mubr.bf16.gmra.mxu0 %v177
    %v718 = vpop.f32.mrf.mxu0
    %v719 = vadd.f32 %v159, %v718
    %v720 = vpop.f32.mrf.mxu0
    %v721 = vadd.f32 %v163, %v720
    %v722 = vpop.f32.mrf.mxu0
    %v723 = vpop.f32.mrf.mxu0
    %724 = vdwg.mxu0
    %725 = vmatprep.subr.bf16.mxu0 %v531
    %726 = vmatpush1.bf16.msra.mxu0 %v530
    %727 = vmatprep.subr.bf16.mxu0 %v529
    %728 = vmatpush1.bf16.msra.mxu0 %v528
    %729 = vmatprep.subr.bf16.mxu0 %v527
    %730 = vmatpush1.bf16.msra.mxu0 %v526
    %731 = vmatprep.subr.bf16.mxu0 %v525
    %732 = vmatpush1.bf16.msra.mxu0 %v524
    %733 = vmatprep.subr.bf16.mxu0 %v523
    %734 = vmatpush1.bf16.msra.mxu0 %v522
    %735 = vmatprep.subr.bf16.mxu0 %v521
    %736 = vmatpush1.bf16.msra.mxu0 %v520
    %737 = vmatprep.subr.bf16.mxu0 %v519
    %738 = vmatpush1.bf16.msra.mxu0 %v518
    %739 = vmatprep.subr.bf16.mxu0 %v517
    %740 = vmatpush1.bf16.msra.mxu0 %v516
    %741 = vmatprep.subr.bf16.mxu0 %v547
    %742 = vmatpush2.bf16.msra.mxu0 %v546
    %743 = vmatprep.subr.bf16.mxu0 %v545
    %744 = vmatpush2.bf16.msra.mxu0 %v544
    %745 = vmatprep.subr.bf16.mxu0 %v543
    %746 = vmatpush2.bf16.msra.mxu0 %v542
    %747 = vmatprep.subr.bf16.mxu0 %v541
    %748 = vmatpush2.bf16.msra.mxu0 %v540
    %749 = vmatprep.subr.bf16.mxu0 %v539
    %750 = vmatpush2.bf16.msra.mxu0 %v538
    %751 = vmatprep.subr.bf16.mxu0 %v537
    %752 = vmatpush2.bf16.msra.mxu0 %v536
    %753 = vmatprep.subr.bf16.mxu0 %v535
    %754 = vmatpush2.bf16.msra.mxu0 %v534
    %755 = vmatprep.subr.bf16.mxu0 %v533
    %756 = vmatpush2.bf16.msra.mxu0 %v532
    %757 = vmatprep.mubr.bf16.mxu0 %v180
    %758 = vmatmul.mubr.bf16.gmra.mxu0 %v179
    %v759 = vpop.f32.mrf.mxu0
    %v760 = vadd.f32 %v719, %v759
    %v761 = vpop.f32.mrf.mxu0
    %v762 = vadd.f32 %v721, %v761
    %v763 = vpop.f32.mrf.mxu0
    %v764 = vpop.f32.mrf.mxu0
    %765 = vdwg.mxu0
    %766 = vmatprep.subr.bf16.mxu0 %v563
    %767 = vmatpush1.bf16.msra.mxu0 %v562
    %768 = vmatprep.subr.bf16.mxu0 %v561
    %769 = vmatpush1.bf16.msra.mxu0 %v560
    %770 = vmatprep.subr.bf16.mxu0 %v559
    %771 = vmatpush1.bf16.msra.mxu0 %v558
    %772 = vmatprep.subr.bf16.mxu0 %v557
    %773 = vmatpush1.bf16.msra.mxu0 %v556
    %774 = vmatprep.subr.bf16.mxu0 %v555
    %775 = vmatpush1.bf16.msra.mxu0 %v554
    %776 = vmatprep.subr.bf16.mxu0 %v553
    %777 = vmatpush1.bf16.msra.mxu0 %v552
    %778 = vmatprep.subr.bf16.mxu0 %v551
    %779 = vmatpush1.bf16.msra.mxu0 %v550
    %780 = vmatprep.subr.bf16.mxu0 %v549
    %781 = vmatpush1.bf16.msra.mxu0 %v548
    %782 = vmatprep.subr.bf16.mxu0 %v579
    %783 = vmatpush2.bf16.msra.mxu0 %v578
    %784 = vmatprep.subr.bf16.mxu0 %v577
    %785 = vmatpush2.bf16.msra.mxu0 %v576
    %786 = vmatprep.subr.bf16.mxu0 %v575
    %787 = vmatpush2.bf16.msra.mxu0 %v574
    %788 = vmatprep.subr.bf16.mxu0 %v573
    %789 = vmatpush2.bf16.msra.mxu0 %v572
    %790 = vmatprep.subr.bf16.mxu0 %v571
    %791 = vmatpush2.bf16.msra.mxu0 %v570
    %792 = vmatprep.subr.bf16.mxu0 %v569
    %793 = vmatpush2.bf16.msra.mxu0 %v568
    %794 = vmatprep.subr.bf16.mxu0 %v567
    %795 = vmatpush2.bf16.msra.mxu0 %v566
    %796 = vmatprep.subr.bf16.mxu0 %v565
    %797 = vmatpush2.bf16.msra.mxu0 %v564
    %798 = vmatprep.mubr.bf16.mxu0 %v182
    %799 = vmatmul.mubr.bf16.gmra.mxu0 %v181
    %v800 = vpop.f32.mrf.mxu0
    %v801 = vadd.f32 %v760, %v800
    %v802 = vpop.f32.mrf.mxu0
    %v803 = vadd.f32 %v762, %v802
    %v804 = vpop.f32.mrf.mxu0
    %v805 = vpop.f32.mrf.mxu0
    %806 = vdwg.mxu0
    %807 = vmatprep.subr.bf16.mxu0 0
    %808 = vmatpush1.bf16.msra.mxu0 0
    %809 = vmatprep.subr.bf16.mxu0 0
    %810 = vmatpush1.bf16.msra.mxu0 0
    %811 = vmatprep.subr.bf16.mxu0 0
    %812 = vmatpush1.bf16.msra.mxu0 0
    %813 = vmatprep.subr.bf16.mxu0 0
    %814 = vmatpush1.bf16.msra.mxu0 0
    %815 = vmatprep.subr.bf16.mxu0 0
    %816 = vmatpush1.bf16.msra.mxu0 0
    %817 = vmatprep.subr.bf16.mxu0 0
    %818 = vmatpush1.bf16.msra.mxu0 0
    %819 = vmatprep.subr.bf16.mxu0 0
    %820 = vmatpush1.bf16.msra.mxu0 0
    %821 = vmatprep.subr.bf16.mxu0 %v581
    %822 = vmatpush1.bf16.msra.mxu0 %v580
    %823 = vmatprep.subr.bf16.mxu0 0
    %824 = vmatpush2.bf16.msra.mxu0 0
    %825 = vmatprep.subr.bf16.mxu0 0
    %826 = vmatpush2.bf16.msra.mxu0 0
    %827 = vmatprep.subr.bf16.mxu0 0
    %828 = vmatpush2.bf16.msra.mxu0 0
    %829 = vmatprep.subr.bf16.mxu0 0
    %830 = vmatpush2.bf16.msra.mxu0 0
    %831 = vmatprep.subr.bf16.mxu0 0
    %832 = vmatpush2.bf16.msra.mxu0 0
    %833 = vmatprep.subr.bf16.mxu0 0
    %834 = vmatpush2.bf16.msra.mxu0 0
    %835 = vmatprep.subr.bf16.mxu0 0
    %836 = vmatpush2.bf16.msra.mxu0 0
    %837 = vmatprep.subr.bf16.mxu0 0
    %838 = vmatpush2.bf16.msra.mxu0 0
    %839 = vmatprep.mubr.bf16.mxu0 0
    %840 = vmatmul.mubr.bf16.gmra.mxu0 %v682
    %v841 = vpop.f32.mrf.mxu0
    %v842 = vadd.f32 %v801, %v841
    %v843 = vpop.f32.mrf.mxu0
    %v844 = vadd.f32 %v803, %v843
    %v845 = vpop.f32.mrf.mxu0
    %v846 = vpop.f32.mrf.mxu0
    %847 = vdwg.mxu0
    %v848 = vsub.f32 0.0, %v842
    %v849 = vsub.f32 0.0, %v844
    %v850 = vmul.f32 %v848, 1.442695
    %v851 = vpow.pop %v850
    %v852 = vmul.f32 %v849, 1.442695
    %v853 = vpow.pop %v852
    %v854 = vadd.f32 %v851, 1.0
    %v855 = vadd.f32 %v853, 1.0
    %v856 = vrcp.pop %v854
    %v857 = vrcp.pop %v855
    %v858 = vmul.f32 %v842, %v856
    %v859 = vmul.f32 %v844, %v857
    %v860 = vpack.c.bf16 %v858, %v858
    %v861 = vpack.c.bf16 %v859, %v859
    %v862 = vld [vmem:[#allocation4] sm:$0xff]
    %v863 = vld [vmem:[#allocation4 + $0x8] sm:$0xff]
    %v864 = vld [vmem:[#allocation4 + $0x10] sm:$0xff]
    %v865 = vld [vmem:[#allocation4 + $0x18] sm:$0xff]
    %v866 = vld [vmem:[#allocation4 + $0x20] sm:$0xff]
    %v867 = vld [vmem:[#allocation4 + $0x28] sm:$0xff]
    %v868 = vld [vmem:[#allocation4 + $0x30] sm:$0xff]
    %v869 = vld [vmem:[#allocation4 + $0x38] sm:$0xff]
    %v870 = vld [vmem:[#allocation4 + $0x40] sm:$0xff]
    %v871 = vld [vmem:[#allocation4 + $0x48] sm:$0xff]
    %v872 = vld [vmem:[#allocation4 + $0x50] sm:$0xff]
    %v873 = vld [vmem:[#allocation4 + $0x58] sm:$0xff]
    %v874 = vld [vmem:[#allocation4 + $0x60] sm:$0xff]
    %v875 = vld [vmem:[#allocation4 + $0x68] sm:$0xff]
    %v876 = vld [vmem:[#allocation4 + $0x70] sm:$0xff]
    %v877 = vld [vmem:[#allocation4 + $0x78] sm:$0xff]
    %v878 = vld [vmem:[#allocation4 + $0x80] sm:$0xff]
    %v879 = vld [vmem:[#allocation4 + $0x88] sm:$0xff]
    %v880 = vld [vmem:[#allocation4 + $0x90] sm:$0xff]
    %v881 = vld [vmem:[#allocation4 + $0x98] sm:$0xff]
    %v882 = vld [vmem:[#allocation4 + $0xa0] sm:$0xff]
    %v883 = vld [vmem:[#allocation4 + $0xa8] sm:$0xff]
    %v884 = vld [vmem:[#allocation4 + $0xb0] sm:$0xff]
    %v885 = vld [vmem:[#allocation4 + $0xb8] sm:$0xff]
    %v886 = vld [vmem:[#allocation4 + $0xc0] sm:$0xff]
    %v887 = vld [vmem:[#allocation4 + $0xc8] sm:$0xff]
    %v888 = vld [vmem:[#allocation4 + $0xd0] sm:$0xff]
    %v889 = vld [vmem:[#allocation4 + $0xd8] sm:$0xff]
    %v890 = vld [vmem:[#allocation4 + $0xe0] sm:$0xff]
    %v891 = vld [vmem:[#allocation4 + $0xe8] sm:$0xff]
    %v892 = vld [vmem:[#allocation4 + $0xf0] sm:$0xff]
    %v893 = vld [vmem:[#allocation4 + $0xf8] sm:$0xff]
    %v894 = vld [vmem:[%s4] sm:$0x3]
    %v896 = vlaneseq
    %v897 = vshrl.u32 %v896, 7
    %v898 = vsub.s32 0, %v897
    %v899 = vrot.slane %v894, %v898
    %v900 = vlaneseq
    %v901 = vshrl.u32 %v900, 7
    %v902 = vsub.s32 1, %v901
    %v903 = vrot.slane %v894, %v902
    %v938 = vunpack.c.l.b16 %v862
    %v939 = vunpack.c.h.b16 %v862
    %v940 = vunpack.c.l.b16 %v863
    %v941 = vunpack.c.h.b16 %v863
    %v942 = vunpack.c.l.b16 %v864
    %v943 = vunpack.c.h.b16 %v864
    %v944 = vunpack.c.l.b16 %v865
    %v945 = vunpack.c.h.b16 %v865
    %v946 = vunpack.c.l.b16 %v866
    %v947 = vunpack.c.h.b16 %v866
    %v948 = vunpack.c.l.b16 %v867
    %v949 = vunpack.c.h.b16 %v867
    %v950 = vunpack.c.l.b16 %v868
    %v951 = vunpack.c.h.b16 %v868
    %v952 = vunpack.c.l.b16 %v869
    %v953 = vunpack.c.h.b16 %v869
    %v954 = vunpack.c.l.b16 %v870
    %v955 = vunpack.c.h.b16 %v870
    %v956 = vunpack.c.l.b16 %v871
    %v957 = vunpack.c.h.b16 %v871
    %v958 = vunpack.c.l.b16 %v872
    %v959 = vunpack.c.h.b16 %v872
    %v960 = vunpack.c.l.b16 %v873
    %v961 = vunpack.c.h.b16 %v873
    %v962 = vunpack.c.l.b16 %v874
    %v963 = vunpack.c.h.b16 %v874
    %v964 = vunpack.c.l.b16 %v875
    %v965 = vunpack.c.h.b16 %v875
    %v966 = vunpack.c.l.b16 %v876
    %v967 = vunpack.c.h.b16 %v876
    %v968 = vunpack.c.l.b16 %v877
    %v969 = vunpack.c.h.b16 %v877
    %v970 = vunpack.c.l.b16 %v878
    %v971 = vunpack.c.h.b16 %v878
    %v972 = vunpack.c.l.b16 %v879
    %v973 = vunpack.c.h.b16 %v879
    %v974 = vunpack.c.l.b16 %v880
    %v975 = vunpack.c.h.b16 %v880
    %v976 = vunpack.c.l.b16 %v881
    %v977 = vunpack.c.h.b16 %v881
    %v978 = vunpack.c.l.b16 %v882
    %v979 = vunpack.c.h.b16 %v882
    %v980 = vunpack.c.l.b16 %v883
    %v981 = vunpack.c.h.b16 %v883
    %v982 = vunpack.c.l.b16 %v884
    %v983 = vunpack.c.h.b16 %v884
    %v984 = vunpack.c.l.b16 %v885
    %v985 = vunpack.c.h.b16 %v885
    %v986 = vunpack.c.l.b16 %v886
    %v987 = vunpack.c.h.b16 %v886
    %v988 = vunpack.c.l.b16 %v887
    %v989 = vunpack.c.h.b16 %v887
    %v990 = vunpack.c.l.b16 %v888
    %v991 = vunpack.c.h.b16 %v888
    %v992 = vunpack.c.l.b16 %v889
    %v993 = vunpack.c.h.b16 %v889
    %v994 = vunpack.c.l.b16 %v890
    %v995 = vunpack.c.h.b16 %v890
    %v996 = vunpack.c.l.b16 %v891
    %v997 = vunpack.c.h.b16 %v891
    %v998 = vunpack.c.l.b16 %v892
    %v999 = vunpack.c.h.b16 %v892
    %v1000 = vunpack.c.l.b16 %v893
    %v1001 = vunpack.c.h.b16 %v893
    %v1002 = vpack.c.b16 %v940, %v938
    %v1003 = vpack.c.b16 %v941, %v939
    %v1004 = vpack.c.b16 %v944, %v942
    %v1005 = vpack.c.b16 %v945, %v943
    %v1006 = vpack.c.b16 %v948, %v946
    %v1007 = vpack.c.b16 %v949, %v947
    %v1008 = vpack.c.b16 %v952, %v950
    %v1009 = vpack.c.b16 %v953, %v951
    %v1010 = vpack.c.b16 %v956, %v954
    %v1011 = vpack.c.b16 %v957, %v955
    %v1012 = vpack.c.b16 %v960, %v958
    %v1013 = vpack.c.b16 %v961, %v959
    %v1014 = vpack.c.b16 %v964, %v962
    %v1015 = vpack.c.b16 %v965, %v963
    %v1016 = vpack.c.b16 %v968, %v966
    %v1017 = vpack.c.b16 %v969, %v967
    %v1018 = vpack.c.b16 %v972, %v970
    %v1019 = vpack.c.b16 %v973, %v971
    %v1020 = vpack.c.b16 %v976, %v974
    %v1021 = vpack.c.b16 %v977, %v975
    %v1022 = vpack.c.b16 %v980, %v978
    %v1023 = vpack.c.b16 %v981, %v979
    %v1024 = vpack.c.b16 %v984, %v982
    %v1025 = vpack.c.b16 %v985, %v983
    %v1026 = vpack.c.b16 %v988, %v986
    %v1027 = vpack.c.b16 %v989, %v987
    %v1028 = vpack.c.b16 %v992, %v990
    %v1029 = vpack.c.b16 %v993, %v991
    %v1030 = vpack.c.b16 %v996, %v994
    %v1031 = vpack.c.b16 %v997, %v995
    %v1032 = vpack.c.b16 %v1000, %v998
    %v1033 = vpack.c.b16 %v1001, %v999
    %1066 = vmatprep.subr.bf16.mxu0 %v1017
    %1067 = vmatpush1.bf16.msra.mxu0 %v1016
    %1068 = vmatprep.subr.bf16.mxu0 %v1015
    %1069 = vmatpush1.bf16.msra.mxu0 %v1014
    %1070 = vmatprep.subr.bf16.mxu0 %v1013
    %1071 = vmatpush1.bf16.msra.mxu0 %v1012
    %1072 = vmatprep.subr.bf16.mxu0 %v1011
    %1073 = vmatpush1.bf16.msra.mxu0 %v1010
    %1074 = vmatprep.subr.bf16.mxu0 %v1009
    %1075 = vmatpush1.bf16.msra.mxu0 %v1008
    %1076 = vmatprep.subr.bf16.mxu0 %v1007
    %1077 = vmatpush1.bf16.msra.mxu0 %v1006
    %1078 = vmatprep.subr.bf16.mxu0 %v1005
    %1079 = vmatpush1.bf16.msra.mxu0 %v1004
    %1080 = vmatprep.subr.bf16.mxu0 %v1003
    %1081 = vmatpush1.bf16.msra.mxu0 %v1002
    %1082 = vmatprep.subr.bf16.mxu0 %v1033
    %1083 = vmatpush2.bf16.msra.mxu0 %v1032
    %1084 = vmatprep.subr.bf16.mxu0 %v1031
    %1085 = vmatpush2.bf16.msra.mxu0 %v1030
    %1086 = vmatprep.subr.bf16.mxu0 %v1029
    %1087 = vmatpush2.bf16.msra.mxu0 %v1028
    %1088 = vmatprep.subr.bf16.mxu0 %v1027
    %1089 = vmatpush2.bf16.msra.mxu0 %v1026
    %1090 = vmatprep.subr.bf16.mxu0 %v1025
    %1091 = vmatpush2.bf16.msra.mxu0 %v1024
    %1092 = vmatprep.subr.bf16.mxu0 %v1023
    %1093 = vmatpush2.bf16.msra.mxu0 %v1022
    %1094 = vmatprep.subr.bf16.mxu0 %v1021
    %1095 = vmatpush2.bf16.msra.mxu0 %v1020
    %1096 = vmatprep.subr.bf16.mxu0 %v1019
    %1097 = vmatpush2.bf16.msra.mxu0 %v1018
    %1098 = vmatprep.mubr.bf16.mxu0 %v861
    %1099 = vmatmul.mubr.bf16.gmra.mxu0 %v860
    %v1100 = vpop.f32.mrf.mxu0
    %v1101 = vadd.f32 %v899, %v1100
    %v1102 = vpop.f32.mrf.mxu0
    %v1103 = vadd.f32 %v903, %v1102
    %v1104 = vpop.f32.mrf.mxu0
    %v1105 = vpop.f32.mrf.mxu0
    %1106 = vdwg.mxu0
    %v1107 = vsub.f32 0.0, %v1101
    %v1108 = vsub.f32 0.0, %v1103
    %v1109 = vmul.f32 %v1107, 1.442695
    %v1110 = vpow.pop %v1109
    %v1111 = vmul.f32 %v1108, 1.442695
    %v1112 = vpow.pop %v1111
    %v1113 = vadd.f32 %v1110, 1.0
    %v1114 = vadd.f32 %v1112, 1.0
    %v1115 = vrcp.pop %v1113
    %v1116 = vrcp.pop %v1114
    %v1117 = vmul.f32 %v1101, %v1115
    %v1118 = vmul.f32 %v1103, %v1116
    %v1119 = vpack.c.bf16 %v1117, %v1117
    %v1120 = vpack.c.bf16 %v1118, %v1118
    %v1121 = vld [vmem:[%s5] sm:$0xf]
    %v1122 = vld [vmem:[%s5 + $0x4] sm:$0xf]
    %v1123 = vld [vmem:[%s5 + $0x8] sm:$0xf]
    %v1124 = vld [vmem:[%s5 + $0xc] sm:$0xf]
    %v1125 = vld [vmem:[%s5 + $0x10] sm:$0xf]
    %v1126 = vld [vmem:[%s5 + $0x14] sm:$0xf]
    %v1127 = vld [vmem:[%s5 + $0x18] sm:$0xf]
    %v1128 = vld [vmem:[%s5 + $0x1c] sm:$0xf]
    %v1129 = vld [vmem:[%s5 + $0x20] sm:$0xf]
    %v1130 = vld [vmem:[%s5 + $0x24] sm:$0xf]
    %v1131 = vld [vmem:[%s5 + $0x28] sm:$0xf]
    %v1132 = vld [vmem:[%s5 + $0x2c] sm:$0xf]
    %v1133 = vld [vmem:[%s5 + $0x30] sm:$0xf]
    %v1134 = vld [vmem:[%s5 + $0x34] sm:$0xf]
    %v1135 = vld [vmem:[%s5 + $0x38] sm:$0xf]
    %v1136 = vld [vmem:[%s5 + $0x3c] sm:$0xf]
    %v1137 = vld [vmem:[%s5 + $0x40] sm:$0xf]
    %v1138 = vld [vmem:[%s5 + $0x44] sm:$0xf]
    %v1139 = vld [vmem:[%s5 + $0x48] sm:$0xf]
    %v1140 = vld [vmem:[%s5 + $0x4c] sm:$0xf]
    %v1141 = vld [vmem:[%s5 + $0x50] sm:$0xf]
    %v1142 = vld [vmem:[%s5 + $0x54] sm:$0xf]
    %v1143 = vld [vmem:[%s5 + $0x58] sm:$0xf]
    %v1144 = vld [vmem:[%s5 + $0x5c] sm:$0xf]
    %v1145 = vld [vmem:[%s5 + $0x60] sm:$0xf]
    %v1146 = vld [vmem:[%s5 + $0x64] sm:$0xf]
    %v1147 = vld [vmem:[%s5 + $0x68] sm:$0xf]
    %v1148 = vld [vmem:[%s5 + $0x6c] sm:$0xf]
    %v1149 = vld [vmem:[%s5 + $0x70] sm:$0xf]
    %v1150 = vld [vmem:[%s5 + $0x74] sm:$0xf]
    %v1151 = vld [vmem:[%s5 + $0x78] sm:$0xf]
    %v1152 = vld [vmem:[%s5 + $0x7c] sm:$0xf]
    %v1185 = vunpack.c.l.b16 %v1121
    %v1186 = vunpack.c.l.b16 %v1122
    %v1187 = vunpack.c.l.b16 %v1123
    %v1188 = vunpack.c.l.b16 %v1124
    %v1189 = vunpack.c.l.b16 %v1125
    %v1190 = vunpack.c.l.b16 %v1126
    %v1191 = vunpack.c.l.b16 %v1127
    %v1192 = vunpack.c.l.b16 %v1128
    %v1193 = vunpack.c.l.b16 %v1129
    %v1194 = vunpack.c.l.b16 %v1130
    %v1195 = vunpack.c.l.b16 %v1131
    %v1196 = vunpack.c.l.b16 %v1132
    %v1197 = vunpack.c.l.b16 %v1133
    %v1198 = vunpack.c.l.b16 %v1134
    %v1199 = vunpack.c.l.b16 %v1135
    %v1200 = vunpack.c.l.b16 %v1136
    %v1201 = vunpack.c.l.b16 %v1137
    %v1202 = vunpack.c.l.b16 %v1138
    %v1203 = vunpack.c.l.b16 %v1139
    %v1204 = vunpack.c.l.b16 %v1140
    %v1205 = vunpack.c.l.b16 %v1141
    %v1206 = vunpack.c.l.b16 %v1142
    %v1207 = vunpack.c.l.b16 %v1143
    %v1208 = vunpack.c.l.b16 %v1144
    %v1209 = vunpack.c.l.b16 %v1145
    %v1210 = vunpack.c.l.b16 %v1146
    %v1211 = vunpack.c.l.b16 %v1147
    %v1212 = vunpack.c.l.b16 %v1148
    %v1213 = vunpack.c.l.b16 %v1149
    %v1214 = vunpack.c.l.b16 %v1150
    %v1215 = vunpack.c.l.b16 %v1151
    %v1216 = vunpack.c.l.b16 %v1152
    %v1217 = vpack.c.b16 %v1186, %v1185
    %v1218 = vpack.c.b16 %v1188, %v1187
    %v1219 = vpack.c.b16 %v1190, %v1189
    %v1220 = vpack.c.b16 %v1192, %v1191
    %v1221 = vpack.c.b16 %v1194, %v1193
    %v1222 = vpack.c.b16 %v1196, %v1195
    %v1223 = vpack.c.b16 %v1198, %v1197
    %v1224 = vpack.c.b16 %v1200, %v1199
    %v1225 = vpack.c.b16 %v1202, %v1201
    %v1226 = vpack.c.b16 %v1204, %v1203
    %v1227 = vpack.c.b16 %v1206, %v1205
    %v1228 = vpack.c.b16 %v1208, %v1207
    %v1229 = vpack.c.b16 %v1210, %v1209
    %v1230 = vpack.c.b16 %v1212, %v1211
    %v1231 = vpack.c.b16 %v1214, %v1213
    %v1232 = vpack.c.b16 %v1216, %v1215
    %1249 = vmatprep.subr.bf16.mxu0 0
    %1250 = vmatpush1.bf16.msra.mxu0 %v1224
    %1251 = vmatprep.subr.bf16.mxu0 0
    %1252 = vmatpush1.bf16.msra.mxu0 %v1223
    %1253 = vmatprep.subr.bf16.mxu0 0
    %1254 = vmatpush1.bf16.msra.mxu0 %v1222
    %1255 = vmatprep.subr.bf16.mxu0 0
    %1256 = vmatpush1.bf16.msra.mxu0 %v1221
    %1257 = vmatprep.subr.bf16.mxu0 0
    %1258 = vmatpush1.bf16.msra.mxu0 %v1220
    %1259 = vmatprep.subr.bf16.mxu0 0
    %1260 = vmatpush1.bf16.msra.mxu0 %v1219
    %1261 = vmatprep.subr.bf16.mxu0 0
    %1262 = vmatpush1.bf16.msra.mxu0 %v1218
    %1263 = vmatprep.subr.bf16.mxu0 0
    %1264 = vmatpush1.bf16.msra.mxu0 %v1217
    %1265 = vmatprep.subr.bf16.mxu0 0
    %1266 = vmatpush2.bf16.msra.mxu0 %v1232
    %1267 = vmatprep.subr.bf16.mxu0 0
    %1268 = vmatpush2.bf16.msra.mxu0 %v1231
    %1269 = vmatprep.subr.bf16.mxu0 0
    %1270 = vmatpush2.bf16.msra.mxu0 %v1230
    %1271 = vmatprep.subr.bf16.mxu0 0
    %1272 = vmatpush2.bf16.msra.mxu0 %v1229
    %1273 = vmatprep.subr.bf16.mxu0 0
    %1274 = vmatpush2.bf16.msra.mxu0 %v1228
    %1275 = vmatprep.subr.bf16.mxu0 0
    %1276 = vmatpush2.bf16.msra.mxu0 %v1227
    %1277 = vmatprep.subr.bf16.mxu0 0
    %1278 = vmatpush2.bf16.msra.mxu0 %v1226
    %1279 = vmatprep.subr.bf16.mxu0 0
    %1280 = vmatpush2.bf16.msra.mxu0 %v1225
    %1281 = vmatprep.mubr.bf16.mxu0 %v1120
    %1282 = vmatmul.mubr.bf16.gmra.mxu0 %v1119
    %v1283 = vpop.f32.mrf.mxu0
    %v1284 = vadd.f32 0.0, %v1283
    %v1285 = vpop.f32.mrf.mxu0
    %v1286 = vpop.f32.mrf.mxu0
    %v1287 = vpop.f32.mrf.mxu0
    %1288 = vdwg.mxu0
    %v1289 = vpack.c.bf16 %v1284, %v1284
    %1290 = vst [vmem:[%s6] sm:$0xf] %v1289
    // Predicated region
    $region34: #{bnnet_forward.1} parent=1 // pred_check
      _
    $region35: #{bnnet_forward.1} parent=1 // pred_check_branch
      %1292 = sbr.rel (0) target = $region37
    $region36: #{bnnet_forward.1} parent=1 // pred_region
      _
    $region37: #{bnnet_forward.1} parent=1 // pred_fallthru
      _
    // Predicated region
    $region38: #{bnnet_forward.1} parent=1 // pred_check
      _
    $region39: #{bnnet_forward.1} parent=1 // pred_check_branch
      %1294 = sbr.rel (0) target = $region41
    $region40: #{bnnet_forward.1} parent=1 // pred_region
      _
    $region41: #{bnnet_forward.1} parent=1 // pred_fallthru
      _
    %1295 = vsyncpa [#allocation3], 1
    %1296 = vsyncpa [#allocation5], 1

</llo_original>
